<compile_context>
chip_gen: v7x
topology: tpu7x:2x2x1
jax: 0.10.0
libtpu: 0.0.40
codegen_flags: <defaults>
</compile_context>

<pallas_src>
import math

import jax
import jax.numpy as jnp
from jax.experimental import pallas as pl
from jax.experimental.pallas import tpu as pltpu

CONTINUOUS_VAR = 0.25       # stands in for args.continuous_var

_LANE = 128                 # lane-block width (columns 0/1 live in the first block)
_MAX_TB = 2048              # batch-tile cap: amortizes per-step overhead, fits v5e VMEM
_PALLAS_MIN_BATCH = 256     # below this, fused XLA beats pallas_call fixed cost


def _diag_gaussian_kernel(x_ref, w_ref, b_ref, mean_ref):
    # Hot path: one MXU matmul per batch tile + a single-tanh rewrite of cols 0/1.
    x = x_ref[...]                       # [TB, K]
    w = w_ref[...]                       # [K, N]   (VMEM-resident across grid)
    b = b_ref[...]                       # [1, N]
    mean = jnp.dot(x, w, preferred_element_type=jnp.float32) + b

    n = mean.shape[1]
    n_head = min(n, _LANE)               # columns 0/1 are in the first lane block
    head = mean[:, :n_head]

    col = jax.lax.broadcasted_iota(jnp.int32, head.shape, dimension=1)
    # sigmoid(m) = 0.5*(1 + tanh(m/2))  =>
    #   0.4 + sigmoid(m)/2.5 = 0.4 + 0.2*(1 + tanh(m*0.5))
    # One tanh over the head block instead of sigmoid + tanh; selects are cheap VPU.
    arg = jnp.where(col == 0, head * 0.5, head)
    t = jnp.tanh(arg)
    col0_val = 0.4 + (t + 1.0) * 0.2
    head = jnp.where(col == 0, col0_val, jnp.where(col == 1, t, head))

    if n_head == n:
        mean_ref[...] = head.astype(mean_ref.dtype)
    else:
        # Wide-output config: untouched lane blocks pass straight through.
        mean_ref[:, :n_head] = head.astype(mean_ref.dtype)
        mean_ref[:, n_head:] = mean[:, n_head:].astype(mean_ref.dtype)


def _pick_batch_tile(batch):
    if batch <= 64:
        return batch                     # single tile; block dim == full dim is legal
    # >= 2 grid steps (so v7x's second TC gets a shard), rounded up to a
    # sublane multiple of 8, capped to keep double-buffered VMEM small.
    half = ((pl.cdiv(batch, 2) + 7) // 8) * 8
    return min(half, _MAX_TB)


def _pallas_action_mean(x, w, b):
    B, K = x.shape
    N = w.shape[1]
    tb = _pick_batch_tile(B)
    grid = (pl.cdiv(B, tb),)             # ragged tail handled by Pallas block masking

    return pl.pallas_call(
        _diag_gaussian_kernel,
        out_shape=jax.ShapeDtypeStruct((B, N), jnp.float32),
        grid=grid,
        in_specs=[
            pl.BlockSpec((tb, K), lambda i: (i, 0)),   # x: pipelined over batch
            pl.BlockSpec((K, N), lambda i: (0, 0)),    # w: resident across grid
            pl.BlockSpec((1, N), lambda i: (0, 0)),    # b: resident across grid
        ],
        out_specs=pl.BlockSpec((tb, N), lambda i: (i, 0)),   # unpadded, no write amp
        compiler_params=pltpu.CompilerParams(
            dimension_semantics=("parallel",),          # megacore sharding on v7x
        ),
    )(x, w, b)


def _xla_action_mean(x, w, b):
    # Small-batch bypass: let XLA fuse the tiny matmul with the column rewrites.
    mean = x @ w + b
    c0 = 0.4 + jax.nn.sigmoid(mean[:, 0]) / 2.5
    c1 = jnp.tanh(mean[:, 1])
    return mean.at[:, 0].set(c0).at[:, 1].set(c1)


def diag_gaussian_forward(x, w, b, continuous_var=CONTINUOUS_VAR, use_pallas=None):
    num_outputs = w.shape[1]
    if use_pallas is None:
        use_pallas = x.shape[0] >= _PALLAS_MIN_BATCH
    action_mean = _pallas_action_mean(x, w, b) if use_pallas else _xla_action_mean(x, w, b)

    # action_logstd is a data-independent constant vector of length num_outputs
    # (no compute worth putting in a kernel).
    action_logstd = jnp.full(
        (num_outputs,), math.log(math.sqrt(continuous_var)), dtype=jnp.float32
    )
    return action_mean, action_logstd


def _reference_forward(x, w, b, continuous_var=CONTINUOUS_VAR):
    mean = x @ w + b
    c0 = 0.4 + jax.nn.sigmoid(mean[:, 0]) / 2.5
    c1 = jnp.tanh(mean[:, 1])
    mean = mean.at[:, 0].set(c0).at[:, 1].set(c1)
    logstd = jnp.full((w.shape[1],), math.log(math.sqrt(continuous_var)), jnp.float32)
    return mean, logstd


if __name__ == "__main__":
    num_inputs = 32
    num_outputs = 8

    key = jax.random.PRNGKey(0)
    kx, kw, kb, kx2 = jax.random.split(key, 4)

    # Deterministic PyTorch-style Linear init: U(-1/sqrt(fan_in), 1/sqrt(fan_in)).
    bound = 1.0 / math.sqrt(num_inputs)
    w = jax.random.uniform(
        kw, (num_inputs, num_outputs), minval=-bound, maxval=bound, dtype=jnp.float32
    )
    b = jax.random.uniform(
        kb, (1, num_outputs), minval=-bound, maxval=bound, dtype=jnp.float32
    )
    # self.logstd (AddBias) parameter — zeros; unused by forward(), kept for parity.
    logstd_param = jnp.zeros((num_outputs,), dtype=jnp.float32)  # noqa: F841

    # Case 1: module-native tiny batch; force the Pallas path to exercise the kernel.
    x_small = jax.random.normal(kx, (8, num_inputs), dtype=jnp.float32)
    mean_s, logstd_s = diag_gaussian_forward(x_small, w, b, use_pallas=True)
    mean_s = jax.block_until_ready(mean_s)
    logstd_s = jax.block_until_ready(logstd_s)

    ref_mean_s, ref_logstd_s = _reference_forward(x_small, w, b)
    assert mean_s.shape == (8, num_outputs)
    assert logstd_s.shape == (num_outputs,)
    assert jnp.allclose(mean_s, ref_mean_s, atol=1e-5, rtol=1e-5)
    assert jnp.allclose(logstd_s, ref_logstd_s, atol=1e-6)

    # Case 2: ragged batch (B % tb != 0, >= 2 grid steps) via the auto Pallas path.
    x_big = jax.random.normal(kx2, (300, num_inputs), dtype=jnp.float32)
    mean_b, logstd_b = diag_gaussian_forward(x_big, w, b)   # B >= 256 -> Pallas
    mean_b = jax.block_until_ready(mean_b)
    ref_mean_b, _ = _reference_forward(x_big, w, b)
    assert mean_b.shape == (300, num_outputs)
    assert jnp.allclose(mean_b, ref_mean_b, atol=1e-5, rtol=1e-5)

    print("KERNEL_OK")
</pallas_src>

<mosaic_0001>
module attributes {stable_mosaic.version = 11 : i64} {
  func.func @_diag_gaussian_kernel(%arg0: i32, %arg1: memref<8x32xf32, #tpu.memory_space<vmem>>, %arg2: memref<32x8xf32, #tpu.memory_space<vmem>>, %arg3: memref<1x8xf32, #tpu.memory_space<vmem>>, %arg4: memref<8x8xf32, #tpu.memory_space<vmem>>) attributes {dimension_semantics = [#tpu.dimension_semantics<parallel>], iteration_bounds = array<i64: 1>, scalar_prefetch = 0 : i64, scratch_operands = 0 : i64, tpu.core_type = #tpu.core_type<tc>, window_params = [{transform_indices = @transform_0, window_bounds = array<i64: 8, 32>}, {pipeline_mode = #tpu.pipeline_mode<synchronous>, transform_indices = @transform_1, window_bounds = array<i64: 32, 8>}, {pipeline_mode = #tpu.pipeline_mode<synchronous>, transform_indices = @transform_2, window_bounds = array<i64: 1, 8>}, {transform_indices = @transform_3, window_bounds = array<i64: 8, 8>}]} {
    %c0 = arith.constant 0 : index
    %c0_0 = arith.constant 0 : index
    %0 = vector.load %arg1[%c0, %c0_0] : memref<8x32xf32, #tpu.memory_space<vmem>>, vector<8x32xf32>
    %c0_1 = arith.constant 0 : index
    %c0_2 = arith.constant 0 : index
    %1 = vector.load %arg2[%c0_1, %c0_2] : memref<32x8xf32, #tpu.memory_space<vmem>>, vector<32x8xf32>
    %c0_3 = arith.constant 0 : index
    %c0_4 = arith.constant 0 : index
    %2 = vector.load %arg3[%c0_3, %c0_4] : memref<1x8xf32, #tpu.memory_space<vmem>>, vector<1x8xf32>
    %cst = arith.constant dense<0.000000e+00> : vector<8x8xf32>
    %3 = tpu.matmul %0, %1, %cst {dimension_numbers = #tpu.dot_dimension_numbers<[1], [0], [0], [1], [0, 0, 1, 1], [], []>} : vector<8x32xf32>, vector<32x8xf32>, vector<8x8xf32> -> vector<8x8xf32>
    %4 = vector.broadcast %2 : vector<1x8xf32> to vector<8x8xf32>
    %5 = arith.addf %3, %4 : vector<8x8xf32>
    %6 = tpu.iota {dimensions = array<i32: 1>} : vector<8x8xi32>
    %c0_i32 = arith.constant 0 : i32
    %7 = vector.broadcast %c0_i32 : i32 to vector<8x8xi32>
    %8 = arith.cmpi eq, %6, %7 : vector<8x8xi32>
    %cst_5 = arith.constant 5.000000e-01 : f32
    %9 = vector.broadcast %cst_5 : f32 to vector<8x8xf32>
    %10 = arith.mulf %5, %9 : vector<8x8xf32>
    %11 = arith.select %8, %10, %5 : vector<8x8xi1>, vector<8x8xf32>
    %12 = math.tanh %11 : vector<8x8xf32>
    %cst_6 = arith.constant 1.000000e+00 : f32
    %13 = vector.broadcast %cst_6 : f32 to vector<8x8xf32>
    %14 = arith.addf %12, %13 : vector<8x8xf32>
    %cst_7 = arith.constant 2.000000e-01 : f32
    %15 = vector.broadcast %cst_7 : f32 to vector<8x8xf32>
    %16 = arith.mulf %14, %15 : vector<8x8xf32>
    %cst_8 = arith.constant 4.000000e-01 : f32
    %17 = vector.broadcast %cst_8 : f32 to vector<8x8xf32>
    %18 = arith.addf %17, %16 : vector<8x8xf32>
    %c0_i32_9 = arith.constant 0 : i32
    %19 = vector.broadcast %c0_i32_9 : i32 to vector<8x8xi32>
    %20 = arith.cmpi eq, %6, %19 : vector<8x8xi32>
    %c1_i32 = arith.constant 1 : i32
    %21 = vector.broadcast %c1_i32 : i32 to vector<8x8xi32>
    %22 = arith.cmpi eq, %6, %21 : vector<8x8xi32>
    %23 = arith.select %22, %12, %5 : vector<8x8xi1>, vector<8x8xf32>
    %24 = arith.select %20, %18, %23 : vector<8x8xi1>, vector<8x8xf32>
    %c0_10 = arith.constant 0 : index
    %c0_11 = arith.constant 0 : index
    %25 = vector.load %arg4[%c0_10, %c0_11] : memref<8x8xf32, #tpu.memory_space<vmem>>, vector<8x8xf32>
    tpu.vector_store %arg4[%c0_10, %c0_11], %24 {strides = array<i32>} : memref<8x8xf32, #tpu.memory_space<vmem>>, vector<8x8xf32>,
    return
  }
  func.func @transform_0(%arg0: i32) -> (i32, i32) {
    %c0_i32 = arith.constant 0 : i32
    %c0_i32_0 = arith.constant 0 : i32
    return %arg0, %c0_i32 : i32, i32
  }
  func.func @transform_1(%arg0: i32) -> (i32, i32) {
    %c0_i32 = arith.constant 0 : i32
    %c0_i32_0 = arith.constant 0 : i32
    %c0_i32_1 = arith.constant 0 : i32
    return %c0_i32, %c0_i32_0 : i32, i32
  }
  func.func @transform_2(%arg0: i32) -> (i32, i32) {
    %c0_i32 = arith.constant 0 : i32
    %c0_i32_0 = arith.constant 0 : i32
    %c0_i32_1 = arith.constant 0 : i32
    return %c0_i32, %c0_i32_0 : i32, i32
  }
  func.func @transform_3(%arg0: i32) -> (i32, i32) {
    %c0_i32 = arith.constant 0 : i32
    %c0_i32_0 = arith.constant 0 : i32
    return %arg0, %c0_i32 : i32, i32
  }
}

</mosaic_0001>

<llo_original>
// kernel: tpu_custom_call.1
$region0: #{tpu_custom_call.1}
  #allocation0 [shape = 'u32[]', space=smem, size = 0x4, offset = 0x4, fixed_abs, tag = 'smem constant byte address 0x4 - core index']
  #allocation1 [shape = 'u32[144,128]{1,0:T(1,128)}', space=vmem, size = 0x12000, scoped, tag = 'internal scratch']
  %s0 = inlined_call_operand.vmem [shape: f32[8,32], index: 0, kind: input, shape index: {}]
  %s1 = inlined_call_operand.vmem [shape: f32[32,8], index: 1, kind: input, shape index: {}]
  %s2 = inlined_call_operand.vmem [shape: f32[1,8], index: 2, kind: input, shape index: {}]
  %s3 = inlined_call_operand.hbm [shape: f32[8,8], index: 3, kind: output, shape index: {}]
  %s4 = sld [smem:[#allocation0]]
  $region22: #{tpu_custom_call.1} parent=0
    _
  %s6 = ssub.s32 1, %s4
  %s7 = scalar_select 0, %s6, %s4
  $region1: #{tpu_custom_call.1} parent=0
    #allocation2 [shape = 'u8[4096]{0}', space=vmem, size = 0x1000, scoped, tag = 'output window, operand 0, single buffered']
    #allocation3 [shape = 's32[1]{0}', space=sflag, size = 0x4, scoped, tag = 'scoped memory for tpu_custom_call.1']
    %8 = vsyncpa [#allocation3], 0
    // Predicated region
    $region2: #{tpu_custom_call.1} parent=1 // pred_check
      _
    $region3: #{tpu_custom_call.1} parent=1 // pred_check_branch
      %10 = sbr.rel (0) target = $region5
    $region4: #{tpu_custom_call.1} parent=1 // pred_region
      _
    $region5: #{tpu_custom_call.1} parent=1 // pred_fallthru
      _
    // Predicated region
    $region6: #{tpu_custom_call.1} parent=1 // pred_check
      _
    $region7: #{tpu_custom_call.1} parent=1 // pred_check_branch
      %12 = sbr.rel (0) target = $region9
    $region8: #{tpu_custom_call.1} parent=1 // pred_region
      _
    $region9: #{tpu_custom_call.1} parent=1 // pred_fallthru
      _
    // Predicated region
    $region10: #{tpu_custom_call.1} parent=1 // pred_check
      _
    $region11: #{tpu_custom_call.1} parent=1 // pred_check_branch
      %14 = sbr.rel (0) target = $region13
    $region12: #{tpu_custom_call.1} parent=1 // pred_region
      _
    $region13: #{tpu_custom_call.1} parent=1 // pred_fallthru
      _
    %v15 = vld [vmem:[%s0] sm:$0xff]
    %v16 = vld [vmem:[%s1] sm:$0xff]
    %v17 = vld [vmem:[%s1 + $0x8] sm:$0xff]
    %v18 = vld [vmem:[%s1 + $0x10] sm:$0xff]
    %v19 = vld [vmem:[%s1 + $0x18] sm:$0xff]
    %v20 = vld [vmem:[%s2] sm:$0x1]
    %v22 = vlaneseq
    %v23 = vshrl.u32 %v22, 7
    %v24 = vsub.s32 0, %v23
    %v25 = vrot.slane %v20, %v24
    %vm27 = vcmask 261120
    %v29 = vsel %vm27, %v15, 0
    %31 = vmatprep.subr.mxu0 0.0
    %32 = vmatpush1.msra.mxu0 %v16
    %33 = vmatprep.subr.mxu0 0.0
    %34 = vmatpush1.msra.mxu0 %v17
    %35 = vmatprep.subr.mxu0 0.0
    %36 = vmatpush1.msra.mxu0 %v18
    %37 = vmatprep.subr.mxu0 0.0
    %38 = vmatpush1.msra.mxu0 %v19
    %39 = vmatprep.subr.mxu0 0.0
    %40 = vmatpush1.msra.mxu0 0.0
    %41 = vmatprep.subr.mxu0 0.0
    %42 = vmatpush1.msra.mxu0 0.0
    %43 = vmatprep.subr.mxu0 0.0
    %44 = vmatpush1.msra.mxu0 0.0
    %45 = vmatprep.subr.mxu0 0.0
    %46 = vmatpush1.msra.mxu0 0.0
    %47 = vmatprep.subr.mxu0 0.0
    %48 = vmatpush1.msra.mxu0 0.0
    %49 = vmatprep.subr.mxu0 0.0
    %50 = vmatpush1.msra.mxu0 0.0
    %51 = vmatprep.subr.mxu0 0.0
    %52 = vmatpush1.msra.mxu0 0.0
    %53 = vmatprep.subr.mxu0 0.0
    %54 = vmatpush1.msra.mxu0 0.0
    %55 = vmatprep.subr.mxu0 0.0
    %56 = vmatpush1.msra.mxu0 0.0
    %57 = vmatprep.subr.mxu0 0.0
    %58 = vmatpush1.msra.mxu0 0.0
    %59 = vmatprep.subr.mxu0 0.0
    %60 = vmatpush1.msra.mxu0 0.0
    %61 = vmatprep.subr.mxu0 0.0
    %62 = vmatpush1.msra.mxu0 0.0
    %63 = vmatprep.subr.mxu0 0.0
    %64 = vmatpush1.msra.mxu0 0.0
    %65 = vmatprep.subr.mxu0 0.0
    %66 = vmatpush1.msra.mxu0 0.0
    %67 = vmatprep.subr.mxu0 0.0
    %68 = vmatpush1.msra.mxu0 0.0
    %69 = vmatprep.subr.mxu0 0.0
    %70 = vmatpush1.msra.mxu0 0.0
    %71 = vmatprep.subr.mxu0 0.0
    %72 = vmatpush1.msra.mxu0 0.0
    %73 = vmatprep.subr.mxu0 0.0
    %74 = vmatpush1.msra.mxu0 0.0
    %75 = vmatprep.subr.mxu0 0.0
    %76 = vmatpush1.msra.mxu0 0.0
    %77 = vmatprep.subr.mxu0 0.0
    %78 = vmatpush1.msra.mxu0 0.0
    %79 = vmatprep.subr.mxu0 0.0
    %80 = vmatpush1.msra.mxu0 0.0
    %81 = vmatprep.subr.mxu0 0.0
    %82 = vmatpush1.msra.mxu0 0.0
    %83 = vmatprep.subr.mxu0 0.0
    %84 = vmatpush1.msra.mxu0 0.0
    %85 = vmatprep.subr.mxu0 0.0
    %86 = vmatpush1.msra.mxu0 0.0
    %87 = vmatprep.subr.mxu0 0.0
    %88 = vmatpush1.msra.mxu0 0.0
    %89 = vmatprep.subr.mxu0 0.0
    %90 = vmatpush1.msra.mxu0 0.0
    %91 = vmatprep.subr.mxu0 0.0
    %92 = vmatpush1.msra.mxu0 0.0
    %93 = vmatprep.subr.mxu0 0.0
    %94 = vmatpush1.msra.mxu0 0.0
    %95 = vmatprep.mubr.f32.mxu0 0.0
    %96 = vmatmul.mubr.f32.gmra.mrb[0].mxu0 %v29
    %v97 = vpop.f32.mrb[0].mxu0
    %v98 = vadd.f32 %v25, %v97
    %v99 = vpop.f32.mrb[0].mxu0
    %100 = vdwg.mxu0
    %v101 = vlaneseq
    %v102 = vand.u32 %v101, 127
    %vm103 = vcmp.eq.s32.totalorder %v102, 0
    %v104 = vmul.f32 %v98, 0.5
    %v105 = vsel %vm103, %v104, %v98
    %v106 = vtanh.pop %v105
    %v107 = vadd.f32 %v106, 1.0
    %v108 = vmul.f32 %v107, 0.2
    %v109 = vadd.f32 %v108, 0.4
    %vm110 = vcmp.eq.s32.totalorder %v102, 1
    %v111 = vsel %vm110, %v106, %v98
    %v112 = vsel %vm103, %v109, %v111
    %vm113 = vcmask 64512
    %114 = vst.msk [vmem:[#allocation2] sm:$0xff] %vm113, %v112
    // Predicated region
    $region14: #{tpu_custom_call.1} parent=1 // pred_check
      _
    $region15: #{tpu_custom_call.1} parent=1 // pred_check_branch
      %116 = sbr.rel (0) target = $region17
    $region16: #{tpu_custom_call.1} parent=1 // pred_region
      %s118 = ssub.s32 128, 128
      %119 = vsyncadd [#allocation3], %s118
      %s121 = sshll.u32 [#allocation2], 4
      %s122 = int_to_ptr.vmem [resolvable:$true] %s121
      %124 = dma.vmem_to_hbm [thread:$0]  %s122, 128, %s3, [#allocation3]
    $region17: #{tpu_custom_call.1} parent=1 // pred_fallthru
      _
    // Predicated region
    $region18: #{tpu_custom_call.1} parent=1 // pred_check
      _
    $region19: #{tpu_custom_call.1} parent=1 // pred_check_branch
      %126 = sbr.rel (0) target = $region21
    $region20: #{tpu_custom_call.1} parent=1 // pred_region
      %127 = dma.done [#allocation3], 128
    $region21: #{tpu_custom_call.1} parent=1 // pred_fallthru
      _
    %128 = vsyncpa [#allocation3], 1

</llo_original>
